<compile_context>
chip_gen: v5e
topology: v5e:2x2
jax: 0.10.0
libtpu: 0.0.40
codegen_flags: <defaults>
</compile_context>

<pallas_src>
import math

import jax
import jax.numpy as jnp
from jax.experimental import pallas as pl
from jax.experimental.pallas import tpu as pltpu


# ----------------------------------------------------------------------------
# Pallas kernel: elementwise add over a lane-dense 2D slab.
# ----------------------------------------------------------------------------
def _add_kernel(x1_ref, x2_ref, o_ref):
    o_ref[...] = x1_ref[...] + x2_ref[...]


# Below this element count, XLA's fused add already hits the HBM roofline and
# kernel dispatch / reshape plumbing dominates.
_MIN_PALLAS_NUMEL = 256 * 1024


def _hw_params():
    """(block_bytes_per_operand, vmem_limit_bytes) tuned per TPU generation."""
    try:
        kind = jax.devices()[0].device_kind.lower()
    except Exception:
        kind = ""
    if "v7" in kind:
        # 64 MiB physical VMEM, 2 TCs, 3.2 TB/s: 4 MiB blocks amortize the
        # per-grid-step overhead; 3 operands x 2 buffers x 4 MiB = 24 MiB.
        return 4 * 1024 * 1024, 48 * 1024 * 1024
    if "v6" in kind:
        # 128 MiB physical VMEM: 4 MiB blocks, generous scoped limit.
        return 4 * 1024 * 1024, 64 * 1024 * 1024
    # v5e and default: firmly HBM-bound at 2 MiB blocks; don't chase bigger.
    return 2 * 1024 * 1024, 32 * 1024 * 1024


def _plan_tiling(numel, itemsize, block_bytes):
    """Pick (lane, rows, tile_m, grid_m) for a (rows, lane) slab.

    Caller guarantees numel % 128 == 0, so no padding is ever needed.
    """
    lane = 128
    for cand in (512, 256):
        if numel % cand == 0:
            lane = cand
            break
    rows = numel // lane

    # Rows per block targeting ~block_bytes per operand, multiple of 8.
    target_rows = max(8, (block_bytes // (lane * itemsize)) // 8 * 8)

    if rows <= 8:
        # Single block equal to the full array dims (no (8,128) divisibility
        # requirement in that case).
        return lane, rows, rows, 1

    # Cap tile_m at ~rows/2 (rounded up to a multiple of 8) so grid_m >= 2 and
    # the "parallel" grid axis can shard across v7x's two TensorCores.
    half = (rows + 1) // 2
    half = ((half + 7) // 8) * 8
    tile_m = max(8, min(target_rows, half))
    grid_m = pl.cdiv(rows, tile_m)   # last block may be partial; Pallas masks it
    return lane, rows, tile_m, grid_m


# ----------------------------------------------------------------------------
# Wrapper: elementwise add of two same-shape tensors via one Pallas call.
# ----------------------------------------------------------------------------
def pallas_add(x1, x2, *, force_pallas=False):
    assert x1.shape == x2.shape and x1.dtype == x2.dtype
    orig_shape = x1.shape
    numel = math.prod(orig_shape)
    itemsize = jnp.dtype(x1.dtype).itemsize

    # Tiny tensors: dispatch + plumbing exceed the add itself.
    if numel == 0 or (not force_pallas and numel < _MIN_PALLAS_NUMEL):
        return x1 + x2

    # Ragged sizes: no lossless lane-dense reshape exists, and padding/slicing
    # around the (un-fusable) custom call would add full extra HBM passes
    # (~3x traffic).  XLA's fused add is already at the HBM roofline here.
    if numel % 128 != 0:
        return x1 + x2

    block_bytes, vmem_limit = _hw_params()
    lane, rows, tile_m, grid_m = _plan_tiling(numel, itemsize, block_bytes)

    # Contiguous row-major reshape: zero-copy, no extra HBM pass.
    x1r = x1.reshape(rows, lane)
    x2r = x2.reshape(rows, lane)

    spec = pl.BlockSpec((tile_m, lane), lambda i: (i, 0))

    out = pl.pallas_call(
        _add_kernel,
        out_shape=jax.ShapeDtypeStruct((rows, lane), x1.dtype),
        grid=(grid_m,),
        in_specs=[spec, spec],
        out_specs=spec,
        compiler_params=pltpu.CompilerParams(
            dimension_semantics=("parallel",),
            vmem_limit_bytes=vmem_limit,
        ),
        cost_estimate=pl.CostEstimate(
            flops=numel,
            transcendentals=0,
            bytes_accessed=3 * numel * itemsize,
        ),
    )(x1r, x2r)

    return out.reshape(orig_shape)


# ----------------------------------------------------------------------------
# Dyn_Add module equivalent
# ----------------------------------------------------------------------------
def _lookup_add(shape):
    # TODO(synk): `lookup_torch('add', ...)` queries an external latency/memory
    # lookup table; no Pallas equivalent exists. Use a deterministic synthetic
    # proxy: latency ~ #elements, memory ~ bytes (3 tensors, f32).
    numel = 1
    for d in shape:
        numel *= d
    lat = float(numel) * 1e-6
    mem = float(numel) * 4.0 * 3.0
    return lat, mem


class DynAddPallas:
    def __init__(self, in_channels, out_channels, granularity, force_pallas=False):
        self._in_channels = in_channels
        self._out_channels = out_channels
        self._granularity = granularity
        self._force_pallas = force_pallas
        self._compiled = False
        self._latencies = None
        self._memories = None

    def __call__(self, x1, x2, weights="full"):
        if isinstance(weights, str) and weights == "full":
            k = self._out_channels // self._granularity
            w = jnp.zeros((k,), jnp.float32).at[-1].set(1.0)
        else:
            w = jnp.asarray(weights, jnp.float32)
            self._granularity = self._out_channels // int(w.shape[0])

        # Hot path: elementwise add (Pallas for large/aligned sizes).
        res = pallas_add(x1, x2, force_pallas=self._force_pallas)

        if not self._compiled:
            lats, mems = [], []
            h, wd = res.shape[-2], res.shape[-1]
            for j in range(int(w.shape[0])):
                add_shape = [1, (j + 1) * self._granularity, h, wd]
                lat, mem = _lookup_add(add_shape)
                lats.append(lat)
                mems.append(mem)
            self._latencies = jnp.asarray(lats, jnp.float32)
            self._memories = jnp.asarray(mems, jnp.float32)
            self._compiled = True

        # k-element weighted sums of host-known constants: plain JAX (a Pallas
        # launch here would be pure dispatch overhead).
        lat_acc = jnp.sum(self._latencies * w)
        mem_acc = jnp.sum(self._memories * w)
        return res, lat_acc, mem_acc


# ----------------------------------------------------------------------------
if __name__ == "__main__":
    key = jax.random.PRNGKey(0)
    k1, k2, k3, k4, k5, k6 = jax.random.split(key, 6)

    # Module demo at small NCHW shape; force_pallas so the kernel is exercised
    # even though this size would normally short-circuit to the fused XLA add.
    N, C, H, W = 2, 4, 16, 16
    x1 = jax.random.normal(k1, (N, C, H, W), jnp.float32)
    x2 = jax.random.normal(k2, (N, C, H, W), jnp.float32)

    module = DynAddPallas(in_channels=C, out_channels=C, granularity=1,
                          force_pallas=True)
    res, lat_acc, mem_acc = module(x1, x2, weights="full")
    jax.block_until_ready((res, lat_acc, mem_acc))

    ref = x1 + x2
    assert jnp.allclose(res, ref, atol=1e-6), "elementwise add mismatch"
    k = C // 1
    w_full = jnp.zeros((k,), jnp.float32).at[-1].set(1.0)
    assert jnp.allclose(lat_acc, jnp.sum(module._latencies * w_full), rtol=1e-6)
    assert jnp.allclose(mem_acc, jnp.sum(module._memories * w_full), rtol=1e-6)

    # Multi-block Pallas path (above the size threshold: lane=512, grid >= 2).
    y1 = jax.random.normal(k3, (4, 32, 64, 64), jnp.float32)   # 524288 elems
    y2 = jax.random.normal(k4, (4, 32, 64, 64), jnp.float32)
    yres = pallas_add(y1, y2)
    jax.block_until_ready(yres)
    assert jnp.allclose(yres, y1 + y2, atol=1e-6), "multi-block add mismatch"

    # Ragged size: falls back to the fused XLA add (no pad/slice HBM passes).
    z1 = jax.random.normal(k5, (1, 3, 7, 5), jnp.float32)
    z2 = jax.random.normal(k6, (1, 3, 7, 5), jnp.float32)
    zres = pallas_add(z1, z2)
    jax.block_until_ready(zres)
    assert jnp.allclose(zres, z1 + z2, atol=1e-6), "ragged add mismatch"

    print("KERNEL_OK")
</pallas_src>

<mosaic_0001>
module attributes {stable_mosaic.version = 11 : i64} {
  func.func @_add_kernel(%arg0: i32, %arg1: memref<4x512xf32, #tpu.memory_space<vmem>>, %arg2: memref<4x512xf32, #tpu.memory_space<vmem>>, %arg3: memref<4x512xf32, #tpu.memory_space<vmem>>) attributes {dimension_semantics = [#tpu.dimension_semantics<parallel>], iteration_bounds = array<i64: 1>, scalar_prefetch = 0 : i64, scratch_operands = 0 : i64, tpu.core_type = #tpu.core_type<tc>, window_params = [{transform_indices = @transform_0, window_bounds = array<i64: 4, 512>}, {transform_indices = @transform_1, window_bounds = array<i64: 4, 512>}, {transform_indices = @transform_2, window_bounds = array<i64: 4, 512>}]} {
    %c0 = arith.constant 0 : index
    %c0_0 = arith.constant 0 : index
    %0 = vector.load %arg1[%c0, %c0_0] : memref<4x512xf32, #tpu.memory_space<vmem>>, vector<4x512xf32>
    %c0_1 = arith.constant 0 : index
    %c0_2 = arith.constant 0 : index
    %1 = vector.load %arg2[%c0_1, %c0_2] : memref<4x512xf32, #tpu.memory_space<vmem>>, vector<4x512xf32>
    %2 = arith.addf %0, %1 : vector<4x512xf32>
    %c0_3 = arith.constant 0 : index
    %c0_4 = arith.constant 0 : index
    %3 = vector.load %arg3[%c0_3, %c0_4] : memref<4x512xf32, #tpu.memory_space<vmem>>, vector<4x512xf32>
    tpu.vector_store %arg3[%c0_3, %c0_4], %2 {strides = array<i32>} : memref<4x512xf32, #tpu.memory_space<vmem>>, vector<4x512xf32>,
    return
  }
  func.func @transform_0(%arg0: i32) -> (i32, i32) {
    %c0_i32 = arith.constant 0 : i32
    %c0_i32_0 = arith.constant 0 : i32
    return %arg0, %c0_i32 : i32, i32
  }
  func.func @transform_1(%arg0: i32) -> (i32, i32) {
    %c0_i32 = arith.constant 0 : i32
    %c0_i32_0 = arith.constant 0 : i32
    return %arg0, %c0_i32 : i32, i32
  }
  func.func @transform_2(%arg0: i32) -> (i32, i32) {
    %c0_i32 = arith.constant 0 : i32
    %c0_i32_0 = arith.constant 0 : i32
    return %arg0, %c0_i32 : i32, i32
  }
}

</mosaic_0001>

<llo_original>
// kernel: tpu_custom_call.1
$region0: #{tpu_custom_call.1}
  #allocation0 [shape = 'u32[]', space=smem, size = 0x4, offset = 0x4, fixed_abs, tag = 'smem constant byte address 0x4 - core index']
  #allocation1 [shape = 'u32[72,128]{1,0:T(1,128)}', space=vmem, size = 0x9000, scoped, tag = 'internal scratch']
  %s0 = inlined_call_operand.hbm [shape: f32[4,512], index: 0, kind: input, shape index: {}]
  %s1 = inlined_call_operand.hbm [shape: f32[4,512], index: 1, kind: input, shape index: {}]
  %s2 = inlined_call_operand.hbm [shape: f32[4,512], index: 2, kind: output, shape index: {}]
  %s3 = sld [smem:[#allocation0]]
  $region26: #{tpu_custom_call.1} parent=0
    _
  %s5 = ssub.s32 1, %s3
  %s6 = scalar_select 0, %s5, %s3
  $region1: #{tpu_custom_call.1} parent=0
    #allocation2 [shape = 'u8[8192]{0}', space=vmem, size = 0x2000, scoped, tag = 'input window, operand 0, single buffered']
    #allocation3 [shape = 's32[1]{0}', space=sflag, size = 0x4, scoped, tag = 'scoped memory for tpu_custom_call.1']
    #allocation4 [shape = 's32[1]{0}', space=sflag, size = 0x4, scoped, tag = 'scoped memory for tpu_custom_call.1']
    #allocation5 [shape = 'u8[8192]{0}', space=vmem, size = 0x2000, scoped, tag = 'input window, operand 1, single buffered']
    #allocation6 [shape = 's32[1]{0}', space=sflag, size = 0x4, scoped, tag = 'scoped memory for tpu_custom_call.1']
    #allocation7 [shape = 'u8[8192]{0}', space=vmem, size = 0x2000, scoped, tag = 'output window, operand 0, single buffered']
    %7 = vsyncpa [#allocation3], 0
    %8 = vsyncpa [#allocation6], 0
    %9 = vsyncpa [#allocation4], 0
    // Predicated region
    $region2: #{tpu_custom_call.1} parent=1 // pred_check
      _
    $region3: #{tpu_custom_call.1} parent=1 // pred_check_branch
      %11 = sbr.rel (0) target = $region5
    $region4: #{tpu_custom_call.1} parent=1 // pred_region
      %13 = vsyncadd [#allocation3], 0
      %s15 = sshll.u32 %s0, 4
      %s16 = int_to_ptr.hbm [resolvable:$true] %s15
      %s17 = sshll.u32 [#allocation2], 4
      %s18 = int_to_ptr.vmem [resolvable:$true] %s17
      %20 = dma.hbm_to_vmem [thread:$0]  %s16, 256, %s18, [#allocation3]
    $region5: #{tpu_custom_call.1} parent=1 // pred_fallthru
      _
    // Predicated region
    $region6: #{tpu_custom_call.1} parent=1 // pred_check
      _
    $region7: #{tpu_custom_call.1} parent=1 // pred_check_branch
      %22 = sbr.rel (0) target = $region9
    $region8: #{tpu_custom_call.1} parent=1 // pred_region
      %24 = vsyncadd [#allocation6], 0
      %s26 = sshll.u32 %s1, 4
      %s27 = int_to_ptr.hbm [resolvable:$true] %s26
      %s28 = sshll.u32 [#allocation5], 4
      %s29 = int_to_ptr.vmem [resolvable:$true] %s28
      %31 = dma.hbm_to_vmem [thread:$0]  %s27, 256, %s29, [#allocation6]
    $region9: #{tpu_custom_call.1} parent=1 // pred_fallthru
      _
    // Predicated region
    $region10: #{tpu_custom_call.1} parent=1 // pred_check
      _
    $region11: #{tpu_custom_call.1} parent=1 // pred_check_branch
      %33 = sbr.rel (0) target = $region13
    $region12: #{tpu_custom_call.1} parent=1 // pred_region
      %35 = dma.done [#allocation3], 256
    $region13: #{tpu_custom_call.1} parent=1 // pred_fallthru
      _
    // Predicated region
    $region14: #{tpu_custom_call.1} parent=1 // pred_check
      _
    $region15: #{tpu_custom_call.1} parent=1 // pred_check_branch
      %37 = sbr.rel (0) target = $region17
    $region16: #{tpu_custom_call.1} parent=1 // pred_region
      %39 = dma.done [#allocation6], 256
    $region17: #{tpu_custom_call.1} parent=1 // pred_fallthru
      _
    %v40 = vld [vmem:[#allocation2] sm:$0xff]
    %v41 = vld [vmem:[#allocation2 + $0x8] sm:$0xff]
    %v42 = vld [vmem:[#allocation5] sm:$0xff]
    %v43 = vld [vmem:[#allocation5 + $0x8] sm:$0xff]
    %v44 = vadd.f32 %v40, %v42
    %v45 = vadd.f32 %v41, %v43
    %46 = vst [vmem:[#allocation7] sm:$0xff] %v44
    %47 = vst [vmem:[#allocation7 + $0x8] sm:$0xff] %v45
    // Predicated region
    $region18: #{tpu_custom_call.1} parent=1 // pred_check
      _
    $region19: #{tpu_custom_call.1} parent=1 // pred_check_branch
      %49 = sbr.rel (0) target = $region21
    $region20: #{tpu_custom_call.1} parent=1 // pred_region
      %51 = vsyncadd [#allocation4], 0
      %s53 = sshll.u32 [#allocation7], 4
      %s54 = int_to_ptr.vmem [resolvable:$true] %s53
      %s55 = sshll.u32 %s2, 4
      %s56 = int_to_ptr.hbm [resolvable:$true] %s55
      %58 = dma.vmem_to_hbm [thread:$0]  %s54, 256, %s56, [#allocation4]
    $region21: #{tpu_custom_call.1} parent=1 // pred_fallthru
      _
    // Predicated region
    $region22: #{tpu_custom_call.1} parent=1 // pred_check
      _
    $region23: #{tpu_custom_call.1} parent=1 // pred_check_branch
      %60 = sbr.rel (0) target = $region25
    $region24: #{tpu_custom_call.1} parent=1 // pred_region
      %62 = dma.done [#allocation4], 256
    $region25: #{tpu_custom_call.1} parent=1 // pred_fallthru
      _
    %63 = vsyncpa [#allocation3], 1
    %64 = vsyncpa [#allocation6], 1
    %65 = vsyncpa [#allocation4], 1

</llo_original>
